<compile_context>
chip_gen: v5e
topology: v5e:2x2
jax: 0.10.0
libtpu: 0.0.40
codegen_flags: <defaults>
</compile_context>

<pallas_src>
import functools

import jax
import jax.numpy as jnp
from jax.experimental import pallas as pl
from jax.experimental.pallas import tpu as pltpu


# -----------------------------------------------------------------------------
# Pallas kernel: fused 2-hidden-layer MLP critic over one batch tile
# -----------------------------------------------------------------------------
def _critic_kernel(s_ref, a_ref, w1s_ref, w1a_ref, b1_ref, w2_ref, b2_ref,
                   w3_ref, bias_ref, o_ref, *, inv_one_minus_discount):
  # Layer 1: two small matmuls replace concat([s, a]) @ w1 (MXU has huge slack here).
  h1 = (jnp.dot(s_ref[...], w1s_ref[...], preferred_element_type=jnp.float32)
        + jnp.dot(a_ref[...], w1a_ref[...], preferred_element_type=jnp.float32)
        + b1_ref[...])
  h1 = jnp.maximum(h1, 0.0)                                          # ReLU
  # Layer 2
  h2 = jnp.dot(h1, w2_ref[...], preferred_element_type=jnp.float32) + b2_ref[...]
  h2 = jnp.maximum(h2, 0.0)                                          # ReLU
  # Scalar head: VPU multiply + cross-lane reduce (XLU slot, not VALU).
  q = jnp.sum(h2 * w3_ref[...], axis=-1)                             # (tile_n,)
  # bias = b3 + average_reward * (1 - discount); then QFitterL2's /(1 - discount).
  q = (q + bias_ref[0, 0]) * inv_one_minus_discount
  # Lane-dense store: batch lives on the 128-lane axis of the output row.
  o_ref[...] = q[None, :]                                            # (1, tile_n)


def qfitter_l2_forward(states, actions, params, *, average_reward, discount,
                       tile_n=4096):
  """QFitterL2.forward. Returns q-values of shape (N,), float32."""
  w1, b1, w2, b2, w3, b3 = params
  states = states.astype(jnp.float32)
  actions = actions.astype(jnp.float32)
  n, d_s = states.shape
  _, d_a = actions.shape
  h1 = w1.shape[1]
  h2 = w2.shape[1]

  # --- tile selection -------------------------------------------------------
  n_pad128 = pl.cdiv(n, 128) * 128          # lane granularity
  tile = min(int(tile_n), n_pad128)
  # Keep >= 2 parallel grid steps when possible so v7x's two TensorCores both get work.
  if n_pad128 >= 256 and n_pad128 // tile < 2:
    tile = max(128, ((n_pad128 // 2 + 127) // 128) * 128)
  n_full = pl.cdiv(n, tile) * tile
  if n_full > n:                            # zero-pad last tile; padded rows are sliced off
    states = jnp.pad(states, ((0, n_full - n), (0, 0)))
    actions = jnp.pad(actions, ((0, n_full - n), (0, 0)))

  # --- parameter prep (tiny host/XLA-side ops) ------------------------------
  w1_s = w1[:d_s].astype(jnp.float32)                   # (d_s, h1)
  w1_a = w1[d_s:].astype(jnp.float32)                   # (d_a, h1)
  w3_row = w3.reshape(1, h2).astype(jnp.float32)        # (1, h2)
  offset = float(average_reward) * (1.0 - float(discount))
  bias = (b3.reshape(1, 1).astype(jnp.float32) + offset)  # b3 + avg_reward*(1-discount)
  inv = 1.0 / (1.0 - float(discount))

  kernel = functools.partial(_critic_kernel, inv_one_minus_discount=inv)

  d_in = d_s + d_a
  cost = pl.CostEstimate(
      flops=2 * n_full * (d_in * h1 + h1 * h2 + h2),
      transcendentals=0,
      bytes_accessed=4 * (n_full * (d_in + 1)
                          + d_in * h1 + h1 * h2 + h2 + h1 + h2 + 1))

  out = pl.pallas_call(
      kernel,
      out_shape=jax.ShapeDtypeStruct((1, n_full), jnp.float32),
      grid_spec=pltpu.PrefetchScalarGridSpec(
          num_scalar_prefetch=0,
          grid=(n_full // tile,),
          in_specs=[
              pl.BlockSpec((tile, d_s), lambda i: (i, 0)),   # states tile
              pl.BlockSpec((tile, d_a), lambda i: (i, 0)),   # actions tile
              pl.BlockSpec((d_s, h1), lambda i: (0, 0)),     # w1_s (resident)
              pl.BlockSpec((d_a, h1), lambda i: (0, 0)),     # w1_a (resident)
              pl.BlockSpec((1, h1), lambda i: (0, 0)),       # b1
              pl.BlockSpec((h1, h2), lambda i: (0, 0)),      # w2
              pl.BlockSpec((1, h2), lambda i: (0, 0)),       # b2
              pl.BlockSpec((1, h2), lambda i: (0, 0)),       # w3 row
              pl.BlockSpec((1, 1), lambda i: (0, 0)),        # b3 + offset
          ],
          out_specs=pl.BlockSpec((1, tile), lambda i: (0, i)),   # lane-dense row
      ),
      compiler_params=pltpu.CompilerParams(
          dimension_semantics=("parallel",),
          vmem_limit_bytes=32 << 20),        # covers v5e's 16 MiB scoped default
      cost_estimate=cost,
  )(states, actions, w1_s, w1_a, b1.reshape(1, -1).astype(jnp.float32),
    w2.astype(jnp.float32), b2.reshape(1, -1).astype(jnp.float32), w3_row, bias)

  return out[0, :n]   # (N,)


# -----------------------------------------------------------------------------
# Deterministic parameter init (mimics nn.Linear default: U(-1/sqrt(fan_in), +))
# -----------------------------------------------------------------------------
def init_params(key, state_dim, action_dim, hidden_sizes):
  dims = [state_dim + action_dim] + list(hidden_sizes) + [1]
  params = []
  for i in range(len(dims) - 1):
    fan_in, fan_out = dims[i], dims[i + 1]
    key, kw, kb = jax.random.split(key, 3)
    bound = 1.0 / jnp.sqrt(fan_in)
    w = jax.random.uniform(kw, (fan_in, fan_out), jnp.float32, -bound, bound)
    b = jax.random.uniform(kb, (fan_out,), jnp.float32, -bound, bound)
    params += [w, b]
  return tuple(params)


# -----------------------------------------------------------------------------
if __name__ == "__main__":
  # Small shapes consistent with the module's forward.
  N = 256
  state_dim, action_dim = 12, 4
  hidden_sizes = (32, 32)
  discount = 0.99
  average_reward = 0.5

  key = jax.random.PRNGKey(0)
  k_s, k_a, k_p = jax.random.split(key, 3)
  states = jax.random.normal(k_s, (N, state_dim), jnp.float32)
  actions = jax.random.normal(k_a, (N, action_dim), jnp.float32)
  params = init_params(k_p, state_dim, action_dim, hidden_sizes)

  q = qfitter_l2_forward(states, actions, params,
                         average_reward=average_reward, discount=discount)
  q = jax.block_until_ready(q)

  # Pure-JAX reference for sanity.
  w1, b1, w2, b2, w3, b3 = params
  x = jnp.concatenate([states, actions], axis=-1)
  h = jnp.maximum(x @ w1 + b1, 0.0)
  h = jnp.maximum(h @ w2 + b2, 0.0)
  ref = ((h @ w3 + b3)[:, 0] + average_reward * (1 - discount)) / (1 - discount)
  assert q.shape == (N,)
  assert jnp.allclose(q, ref, rtol=1e-5, atol=1e-5)

  # TODO(synk): training-side methods (update/soft_update/optimizer, clamping in
  # estimate_returns) are host-level training logic, not part of forward().
  print("KERNEL_OK")
</pallas_src>

<mosaic_0001>
module attributes {stable_mosaic.version = 11 : i64} {
  func.func @_critic_kernel(%arg0: i32, %arg1: memref<128x12xf32, #tpu.memory_space<vmem>>, %arg2: memref<128x4xf32, #tpu.memory_space<vmem>>, %arg3: memref<12x32xf32, #tpu.memory_space<vmem>>, %arg4: memref<4x32xf32, #tpu.memory_space<vmem>>, %arg5: memref<1x32xf32, #tpu.memory_space<vmem>>, %arg6: memref<32x32xf32, #tpu.memory_space<vmem>>, %arg7: memref<1x32xf32, #tpu.memory_space<vmem>>, %arg8: memref<1x32xf32, #tpu.memory_space<vmem>>, %arg9: memref<1x1xf32, #tpu.memory_space<vmem>>, %arg10: memref<1x128xf32, #tpu.memory_space<vmem>>) attributes {dimension_semantics = [#tpu.dimension_semantics<parallel>], iteration_bounds = array<i64: 2>, scalar_prefetch = 0 : i64, scratch_operands = 0 : i64, tpu.core_type = #tpu.core_type<tc>, window_params = [{transform_indices = @transform_0, window_bounds = array<i64: 128, 12>}, {transform_indices = @transform_1, window_bounds = array<i64: 128, 4>}, {pipeline_mode = #tpu.pipeline_mode<synchronous>, transform_indices = @transform_2, window_bounds = array<i64: 12, 32>}, {pipeline_mode = #tpu.pipeline_mode<synchronous>, transform_indices = @transform_3, window_bounds = array<i64: 4, 32>}, {pipeline_mode = #tpu.pipeline_mode<synchronous>, transform_indices = @transform_4, window_bounds = array<i64: 1, 32>}, {pipeline_mode = #tpu.pipeline_mode<synchronous>, transform_indices = @transform_5, window_bounds = array<i64: 32, 32>}, {pipeline_mode = #tpu.pipeline_mode<synchronous>, transform_indices = @transform_6, window_bounds = array<i64: 1, 32>}, {pipeline_mode = #tpu.pipeline_mode<synchronous>, transform_indices = @transform_7, window_bounds = array<i64: 1, 32>}, {pipeline_mode = #tpu.pipeline_mode<synchronous>, transform_indices = @transform_8, window_bounds = array<i64: 1, 1>}, {transform_indices = @transform_9, window_bounds = array<i64: 1, 128>}]} {
    %c0 = arith.constant 0 : index
    %c0_0 = arith.constant 0 : index
    %0 = vector.load %arg1[%c0, %c0_0] : memref<128x12xf32, #tpu.memory_space<vmem>>, vector<128x12xf32>
    %c0_1 = arith.constant 0 : index
    %c0_2 = arith.constant 0 : index
    %1 = vector.load %arg3[%c0_1, %c0_2] : memref<12x32xf32, #tpu.memory_space<vmem>>, vector<12x32xf32>
    %cst = arith.constant dense<0.000000e+00> : vector<128x32xf32>
    %2 = tpu.matmul %0, %1, %cst {dimension_numbers = #tpu.dot_dimension_numbers<[1], [0], [0], [1], [0, 0, 1, 1], [], []>} : vector<128x12xf32>, vector<12x32xf32>, vector<128x32xf32> -> vector<128x32xf32>
    %c0_3 = arith.constant 0 : index
    %c0_4 = arith.constant 0 : index
    %3 = vector.load %arg2[%c0_3, %c0_4] : memref<128x4xf32, #tpu.memory_space<vmem>>, vector<128x4xf32>
    %c0_5 = arith.constant 0 : index
    %c0_6 = arith.constant 0 : index
    %4 = vector.load %arg4[%c0_5, %c0_6] : memref<4x32xf32, #tpu.memory_space<vmem>>, vector<4x32xf32>
    %cst_7 = arith.constant dense<0.000000e+00> : vector<128x32xf32>
    %5 = tpu.matmul %3, %4, %cst_7 {dimension_numbers = #tpu.dot_dimension_numbers<[1], [0], [0], [1], [0, 0, 1, 1], [], []>} : vector<128x4xf32>, vector<4x32xf32>, vector<128x32xf32> -> vector<128x32xf32>
    %6 = arith.addf %2, %5 : vector<128x32xf32>
    %c0_8 = arith.constant 0 : index
    %c0_9 = arith.constant 0 : index
    %7 = vector.load %arg5[%c0_8, %c0_9] : memref<1x32xf32, #tpu.memory_space<vmem>>, vector<1x32xf32>
    %8 = vector.broadcast %7 : vector<1x32xf32> to vector<128x32xf32>
    %9 = arith.addf %6, %8 : vector<128x32xf32>
    %cst_10 = arith.constant 0.000000e+00 : f32
    %10 = vector.broadcast %cst_10 : f32 to vector<128x32xf32>
    %11 = arith.maximumf %9, %10 : vector<128x32xf32>
    %c0_11 = arith.constant 0 : index
    %c0_12 = arith.constant 0 : index
    %12 = vector.load %arg6[%c0_11, %c0_12] : memref<32x32xf32, #tpu.memory_space<vmem>>, vector<32x32xf32>
    %cst_13 = arith.constant dense<0.000000e+00> : vector<128x32xf32>
    %13 = tpu.matmul %11, %12, %cst_13 {dimension_numbers = #tpu.dot_dimension_numbers<[1], [0], [0], [1], [0, 0, 1, 1], [], []>} : vector<128x32xf32>, vector<32x32xf32>, vector<128x32xf32> -> vector<128x32xf32>
    %c0_14 = arith.constant 0 : index
    %c0_15 = arith.constant 0 : index
    %14 = vector.load %arg7[%c0_14, %c0_15] : memref<1x32xf32, #tpu.memory_space<vmem>>, vector<1x32xf32>
    %15 = vector.broadcast %14 : vector<1x32xf32> to vector<128x32xf32>
    %16 = arith.addf %13, %15 : vector<128x32xf32>
    %cst_16 = arith.constant 0.000000e+00 : f32
    %17 = vector.broadcast %cst_16 : f32 to vector<128x32xf32>
    %18 = arith.maximumf %16, %17 : vector<128x32xf32>
    %c0_17 = arith.constant 0 : index
    %c0_18 = arith.constant 0 : index
    %19 = vector.load %arg8[%c0_17, %c0_18] : memref<1x32xf32, #tpu.memory_space<vmem>>, vector<1x32xf32>
    %20 = vector.broadcast %19 : vector<1x32xf32> to vector<128x32xf32>
    %21 = arith.mulf %18, %20 : vector<128x32xf32>
    %cst_19 = arith.constant dense<0.000000e+00> : vector<128xf32>
    %22 = vector.multi_reduction <add>, %21, %cst_19 [1] : vector<128x32xf32> to vector<128xf32>
    %c0_20 = arith.constant 0 : index
    %c0_21 = arith.constant 0 : index
    %23 = vector.load %arg9[%c0_20, %c0_21] : memref<1x1xf32, #tpu.memory_space<vmem>>, vector<1x1xf32>
    %24 = vector.extract %23[0, 0] : f32 from vector<1x1xf32>
    %25 = vector.broadcast %24 : f32 to vector<128xf32>
    %26 = arith.addf %22, %25 : vector<128xf32>
    %cst_22 = arith.constant 1.000000e+02 : f32
    %27 = vector.broadcast %cst_22 : f32 to vector<128xf32>
    %28 = arith.mulf %26, %27 : vector<128xf32>
    %29 = vector.shape_cast %28 : vector<128xf32> to vector<1x128xf32>
    %c0_23 = arith.constant 0 : index
    %c0_24 = arith.constant 0 : index
    %30 = vector.load %arg10[%c0_23, %c0_24] : memref<1x128xf32, #tpu.memory_space<vmem>>, vector<1x128xf32>
    tpu.vector_store %arg10[%c0_23, %c0_24], %29 {strides = array<i32>} : memref<1x128xf32, #tpu.memory_space<vmem>>, vector<1x128xf32>,
    return
  }
  func.func @transform_0(%arg0: i32) -> (i32, i32) {
    %c0_i32 = arith.constant 0 : i32
    %c0_i32_0 = arith.constant 0 : i32
    return %arg0, %c0_i32 : i32, i32
  }
  func.func @transform_1(%arg0: i32) -> (i32, i32) {
    %c0_i32 = arith.constant 0 : i32
    %c0_i32_0 = arith.constant 0 : i32
    return %arg0, %c0_i32 : i32, i32
  }
  func.func @transform_2(%arg0: i32) -> (i32, i32) {
    %c0_i32 = arith.constant 0 : i32
    %c0_i32_0 = arith.constant 0 : i32
    %c0_i32_1 = arith.constant 0 : i32
    return %c0_i32, %c0_i32_0 : i32, i32
  }
  func.func @transform_3(%arg0: i32) -> (i32, i32) {
    %c0_i32 = arith.constant 0 : i32
    %c0_i32_0 = arith.constant 0 : i32
    %c0_i32_1 = arith.constant 0 : i32
    return %c0_i32, %c0_i32_0 : i32, i32
  }
  func.func @transform_4(%arg0: i32) -> (i32, i32) {
    %c0_i32 = arith.constant 0 : i32
    %c0_i32_0 = arith.constant 0 : i32
    %c0_i32_1 = arith.constant 0 : i32
    return %c0_i32, %c0_i32_0 : i32, i32
  }
  func.func @transform_5(%arg0: i32) -> (i32, i32) {
    %c0_i32 = arith.constant 0 : i32
    %c0_i32_0 = arith.constant 0 : i32
    %c0_i32_1 = arith.constant 0 : i32
    return %c0_i32, %c0_i32_0 : i32, i32
  }
  func.func @transform_6(%arg0: i32) -> (i32, i32) {
    %c0_i32 = arith.constant 0 : i32
    %c0_i32_0 = arith.constant 0 : i32
    %c0_i32_1 = arith.constant 0 : i32
    return %c0_i32, %c0_i32_0 : i32, i32
  }
  func.func @transform_7(%arg0: i32) -> (i32, i32) {
    %c0_i32 = arith.constant 0 : i32
    %c0_i32_0 = arith.constant 0 : i32
    %c0_i32_1 = arith.constant 0 : i32
    return %c0_i32, %c0_i32_0 : i32, i32
  }
  func.func @transform_8(%arg0: i32) -> (i32, i32) {
    %c0_i32 = arith.constant 0 : i32
    %c0_i32_0 = arith.constant 0 : i32
    %c0_i32_1 = arith.constant 0 : i32
    return %c0_i32, %c0_i32_0 : i32, i32
  }
  func.func @transform_9(%arg0: i32) -> (i32, i32) {
    %c0_i32 = arith.constant 0 : i32
    %c0_i32_0 = arith.constant 0 : i32
    return %c0_i32, %arg0 : i32, i32
  }
}

</mosaic_0001>

<llo_original>
// kernel: tpu_custom_call.1
$region0: #{tpu_custom_call.1}
  #allocation0 [shape = 'u32[]', space=smem, size = 0x4, offset = 0x4, fixed_abs, tag = 'smem constant byte address 0x4 - core index']
  #allocation1 [shape = 'u32[72,128]{1,0:T(1,128)}', space=vmem, size = 0x9000, scoped, tag = 'internal scratch']
  #allocation2 [shape = 'f32[1,1]{1,0:T(1,128)S(1)}', space=vmem, size = 0x200, scoped, tag = 'scoped memory for tpu_custom_call.1']
  %s0 = inlined_call_operand.vmem [shape: f32[256,12], index: 0, kind: input, shape index: {}]
  %s1 = inlined_call_operand.vmem [shape: f32[256,4], index: 1, kind: input, shape index: {}]
  %s2 = inlined_call_operand.vmem [shape: f32[12,32], index: 2, kind: input, shape index: {}]
  %s3 = inlined_call_operand.vmem [shape: f32[4,32], index: 3, kind: input, shape index: {}]
  %s4 = inlined_call_operand.vmem [shape: f32[1,32], index: 4, kind: input, shape index: {}]
  %s5 = inlined_call_operand.vmem [shape: f32[32,32], index: 5, kind: input, shape index: {}]
  %s6 = inlined_call_operand.vmem [shape: f32[1,32], index: 6, kind: input, shape index: {}]
  %s7 = inlined_call_operand.vmem [shape: f32[1,32], index: 7, kind: input, shape index: {}]
  %s8 = inlined_call_operand.<no memory space> [shape: f32[1,1], index: 8, kind: input, shape index: {}]
  %s9 = inlined_call_operand.hbm [shape: f32[1,256], index: 9, kind: output, shape index: {}]
  %s10 = sld [smem:[#allocation0]]
  $region69: #{tpu_custom_call.1} parent=0
    _
  %s12 = ssub.s32 1, %s10
  %s13 = scalar_select 0, %s12, %s10
  %v14 = vstv %s8
  %15 = vst [vmem:[#allocation2] sm:$0x1] %v14
  $region1: #{tpu_custom_call.1} parent=0
    #allocation3 [shape = 'u8[1024]{0}', space=vmem, size = 0x400, scoped, tag = 'output window, operand 0']
    #allocation4 [shape = 's32[2]{0}', space=sflag, size = 0x8, scoped, tag = 'scoped memory for tpu_custom_call.1']
    %16 = vsyncpa [#allocation4], 0
    %s17 = scalar_lea.sflag [#allocation4], 1
    %18 = vsyncpa %s17, 0
    loop: start=0, step=1, limit=4
    $region2: #{tpu_custom_call.1} parent=1 // loop_pre_header
      _
    $region3: #{tpu_custom_call.1} parent=1 // loop_header
      %s20 = sphi 0, %s24
      %p21 = scmp.ge.s32.totalorder %s20, 4
      %s30 = sphi 0, %s32
      %s33 = sphi 0, %s30
      %s34 = sphi 0, %s33
      %s50 = sphi 0, %s34
      %s56 = sphi 0, %s58
      %s59 = sphi 0, %s56
      %s60 = sphi 0, %s59
      %s76 = sphi 0, %s60
      %s80 = sphi 0, %s80
      %s82 = sphi 0, %s80
      %s83 = sphi 0, %s82
      %s97 = sphi 0, %s83
      %s101 = sphi 0, %s101
      %s103 = sphi 0, %s101
      %s104 = sphi 0, %s103
      %s118 = sphi 0, %s104
      %s122 = sphi 0, %s122
      %s124 = sphi 0, %s122
      %s125 = sphi 0, %s124
      %s139 = sphi 0, %s125
      %s143 = sphi 0, %s143
      %s145 = sphi 0, %s143
      %s146 = sphi 0, %s145
      %s160 = sphi 0, %s146
      %s164 = sphi 0, %s164
      %s166 = sphi 0, %s164
      %s167 = sphi 0, %s166
      %s181 = sphi 0, %s167
      %s185 = sphi 0, %s185
      %s187 = sphi 0, %s185
      %s188 = sphi 0, %s187
      %s202 = sphi 0, %s188
      %s206 = sphi 0, %s206
      %s208 = sphi 0, %s206
      %s209 = sphi 0, %s208
      %s223 = sphi 0, %s209
      %s229 = sphi 0, %s231
      %s232 = sphi 0, %s229
      %s233 = sphi 0, %s232
      %s249 = sphi 0, %s233
    $region4: #{tpu_custom_call.1} parent=1 // loop_header_branch
      %23 = sbr.rel (%p21) target = $region8
    $region5: #{tpu_custom_call.1} parent=1 // loop_body
      %s25 = ssub.s32 %s20, 1
      %s26 = ssub.s32 %s20, 2
      %s27 = sadd.s32 %s20, 1
      %s28 = ssub.s32 %s20, %s27
      %p29 = scmp.eq.s32.totalorder %s28, 0
      %s31 = sadd.s32 %s30, 1
      %s32 = scalar_select %p29, %s30, %s31
      %p35 = pneg %p29
      %p36 = scmp.eq.s32.totalorder %s20, 1
      %p37 = por %p35, %p36
      %p38 = scmp.ne.s32.totalorder %s30, %s33
      %p39 = scmp.eq.s32.totalorder %s20, 0
      %p40 = por %p38, %p39
      %p41 = scmp.ne.s32.totalorder %s30, %s33
      %p42 = scmp.eq.s32.totalorder %s25, 1
      %p43 = por %p41, %p42
      %p44 = scmp.ne.s32.totalorder %s33, %s34
      %p45 = scmp.eq.s32.totalorder %s25, 0
      %p46 = por %p44, %p45
      %p47 = scmp.ne.s32.totalorder %s33, %s34
      %p48 = scmp.eq.s32.totalorder %s26, 1
      %p49 = por %p47, %p48
      %p51 = scmp.ne.s32.totalorder %s34, %s50
      %p52 = scmp.eq.s32.totalorder %s26, 0
      %p53 = por %p51, %p52
      %s54 = ssub.s32 %s20, %s27
      %p55 = scmp.eq.s32.totalorder %s54, 0
      %s57 = sadd.s32 %s56, 1
      %s58 = scalar_select %p55, %s56, %s57
      %p61 = pneg %p55
      %p62 = scmp.eq.s32.totalorder %s20, 1
      %p63 = por %p61, %p62
      %p64 = scmp.ne.s32.totalorder %s56, %s59
      %p65 = scmp.eq.s32.totalorder %s20, 0
      %p66 = por %p64, %p65
      %p67 = scmp.ne.s32.totalorder %s56, %s59
      %p68 = scmp.eq.s32.totalorder %s25, 1
      %p69 = por %p67, %p68
      %p70 = scmp.ne.s32.totalorder %s59, %s60
      %p71 = scmp.eq.s32.totalorder %s25, 0
      %p72 = por %p70, %p71
      %p73 = scmp.ne.s32.totalorder %s59, %s60
      %p74 = scmp.eq.s32.totalorder %s26, 1
      %p75 = por %p73, %p74
      %p77 = scmp.ne.s32.totalorder %s60, %s76
      %p78 = scmp.eq.s32.totalorder %s26, 0
      %p79 = por %p77, %p78
      %s81 = sadd.s32 %s80, 1
      %p84 = scmp.eq.s32.totalorder %s20, 1
      %p85 = scmp.ne.s32.totalorder %s80, %s82
      %p86 = scmp.eq.s32.totalorder %s20, 0
      %p87 = por %p85, %p86
      %p88 = scmp.ne.s32.totalorder %s80, %s82
      %p89 = scmp.eq.s32.totalorder %s25, 1
      %p90 = por %p88, %p89
      %p91 = scmp.ne.s32.totalorder %s82, %s83
      %p92 = scmp.eq.s32.totalorder %s25, 0
      %p93 = por %p91, %p92
      %p94 = scmp.ne.s32.totalorder %s82, %s83
      %p95 = scmp.eq.s32.totalorder %s26, 1
      %p96 = por %p94, %p95
      %p98 = scmp.ne.s32.totalorder %s83, %s97
      %p99 = scmp.eq.s32.totalorder %s26, 0
      %p100 = por %p98, %p99
      %s102 = sadd.s32 %s101, 1
      %p105 = scmp.eq.s32.totalorder %s20, 1
      %p106 = scmp.ne.s32.totalorder %s101, %s103
      %p107 = scmp.eq.s32.totalorder %s20, 0
      %p108 = por %p106, %p107
      %p109 = scmp.ne.s32.totalorder %s101, %s103
      %p110 = scmp.eq.s32.totalorder %s25, 1
      %p111 = por %p109, %p110
      %p112 = scmp.ne.s32.totalorder %s103, %s104
      %p113 = scmp.eq.s32.totalorder %s25, 0
      %p114 = por %p112, %p113
      %p115 = scmp.ne.s32.totalorder %s103, %s104
      %p116 = scmp.eq.s32.totalorder %s26, 1
      %p117 = por %p115, %p116
      %p119 = scmp.ne.s32.totalorder %s104, %s118
      %p120 = scmp.eq.s32.totalorder %s26, 0
      %p121 = por %p119, %p120
      %s123 = sadd.s32 %s122, 1
      %p126 = scmp.eq.s32.totalorder %s20, 1
      %p127 = scmp.ne.s32.totalorder %s122, %s124
      %p128 = scmp.eq.s32.totalorder %s20, 0
      %p129 = por %p127, %p128
      %p130 = scmp.ne.s32.totalorder %s122, %s124
      %p131 = scmp.eq.s32.totalorder %s25, 1
      %p132 = por %p130, %p131
      %p133 = scmp.ne.s32.totalorder %s124, %s125
      %p134 = scmp.eq.s32.totalorder %s25, 0
      %p135 = por %p133, %p134
      %p136 = scmp.ne.s32.totalorder %s124, %s125
      %p137 = scmp.eq.s32.totalorder %s26, 1
      %p138 = por %p136, %p137
      %p140 = scmp.ne.s32.totalorder %s125, %s139
      %p141 = scmp.eq.s32.totalorder %s26, 0
      %p142 = por %p140, %p141
      %s144 = sadd.s32 %s143, 1
      %p147 = scmp.eq.s32.totalorder %s20, 1
      %p148 = scmp.ne.s32.totalorder %s143, %s145
      %p149 = scmp.eq.s32.totalorder %s20, 0
      %p150 = por %p148, %p149
      %p151 = scmp.ne.s32.totalorder %s143, %s145
      %p152 = scmp.eq.s32.totalorder %s25, 1
      %p153 = por %p151, %p152
      %p154 = scmp.ne.s32.totalorder %s145, %s146
      %p155 = scmp.eq.s32.totalorder %s25, 0
      %p156 = por %p154, %p155
      %p157 = scmp.ne.s32.totalorder %s145, %s146
      %p158 = scmp.eq.s32.totalorder %s26, 1
      %p159 = por %p157, %p158
      %p161 = scmp.ne.s32.totalorder %s146, %s160
      %p162 = scmp.eq.s32.totalorder %s26, 0
      %p163 = por %p161, %p162
      %s165 = sadd.s32 %s164, 1
      %p168 = scmp.eq.s32.totalorder %s20, 1
      %p169 = scmp.ne.s32.totalorder %s164, %s166
      %p170 = scmp.eq.s32.totalorder %s20, 0
      %p171 = por %p169, %p170
      %p172 = scmp.ne.s32.totalorder %s164, %s166
      %p173 = scmp.eq.s32.totalorder %s25, 1
      %p174 = por %p172, %p173
      %p175 = scmp.ne.s32.totalorder %s166, %s167
      %p176 = scmp.eq.s32.totalorder %s25, 0
      %p177 = por %p175, %p176
      %p178 = scmp.ne.s32.totalorder %s166, %s167
      %p179 = scmp.eq.s32.totalorder %s26, 1
      %p180 = por %p178, %p179
      %p182 = scmp.ne.s32.totalorder %s167, %s181
      %p183 = scmp.eq.s32.totalorder %s26, 0
      %p184 = por %p182, %p183
      %s186 = sadd.s32 %s185, 1
      %p189 = scmp.eq.s32.totalorder %s20, 1
      %p190 = scmp.ne.s32.totalorder %s185, %s187
      %p191 = scmp.eq.s32.totalorder %s20, 0
      %p192 = por %p190, %p191
      %p193 = scmp.ne.s32.totalorder %s185, %s187
      %p194 = scmp.eq.s32.totalorder %s25, 1
      %p195 = por %p193, %p194
      %p196 = scmp.ne.s32.totalorder %s187, %s188
      %p197 = scmp.eq.s32.totalorder %s25, 0
      %p198 = por %p196, %p197
      %p199 = scmp.ne.s32.totalorder %s187, %s188
      %p200 = scmp.eq.s32.totalorder %s26, 1
      %p201 = por %p199, %p200
      %p203 = scmp.ne.s32.totalorder %s188, %s202
      %p204 = scmp.eq.s32.totalorder %s26, 0
      %p205 = por %p203, %p204
      %s207 = sadd.s32 %s206, 1
      %p210 = scmp.eq.s32.totalorder %s20, 1
      %p211 = scmp.ne.s32.totalorder %s206, %s208
      %p212 = scmp.eq.s32.totalorder %s20, 0
      %p213 = por %p211, %p212
      %p214 = scmp.ne.s32.totalorder %s206, %s208
      %p215 = scmp.eq.s32.totalorder %s25, 1
      %p216 = por %p214, %p215
      %p217 = scmp.ne.s32.totalorder %s208, %s209
      %p218 = scmp.eq.s32.totalorder %s25, 0
      %p219 = por %p217, %p218
      %p220 = scmp.ne.s32.totalorder %s208, %s209
      %p221 = scmp.eq.s32.totalorder %s26, 1
      %p222 = por %p220, %p221
      %p224 = scmp.ne.s32.totalorder %s209, %s223
      %p225 = scmp.eq.s32.totalorder %s26, 0
      %p226 = por %p224, %p225
      %s227 = ssub.s32 %s20, %s27
      %p228 = scmp.eq.s32.totalorder %s227, 0
      %s230 = sadd.s32 %s229, 1
      %s231 = scalar_select %p228, %s229, %s230
      %p234 = pneg %p228
      %p235 = scmp.eq.s32.totalorder %s20, 1
      %p236 = por %p234, %p235
      %p237 = scmp.ne.s32.totalorder %s229, %s232
      %p238 = scmp.eq.s32.totalorder %s20, 0
      %p239 = por %p237, %p238
      %p240 = scmp.ne.s32.totalorder %s229, %s232
      %p241 = scmp.eq.s32.totalorder %s25, 1
      %p242 = por %p240, %p241
      %p243 = scmp.ne.s32.totalorder %s232, %s233
      %p244 = scmp.eq.s32.totalorder %s25, 0
      %p245 = por %p243, %p244
      %p246 = scmp.ne.s32.totalorder %s232, %s233
      %p247 = scmp.eq.s32.totalorder %s26, 1
      %p248 = por %p246, %p247
      %p250 = scmp.ne.s32.totalorder %s233, %s249
      %p251 = scmp.eq.s32.totalorder %s26, 0
      %p252 = por %p250, %p251
      %p253 = scmp.le.s32.totalorder 1, %s20
      %p254 = scmp.lt.s32.totalorder %s20, 3
      %p255 = pnand %p253, %p254
      %p256 = pneg %p255
      // Predicated region
      $region9: #{tpu_custom_call.1} parent=5 // pred_check
        _
      $region10: #{tpu_custom_call.1} parent=5 // pred_check_branch
        %258 = sbr.rel (%p255) target = $region12
      $region11: #{tpu_custom_call.1} parent=5 // pred_region
        %s259 = ssub.s32 %s20, 1
        // Predicated region
        $region13: #{tpu_custom_call.1} parent=11 // pred_check
          %p260 = pneg %p93
        $region14: #{tpu_custom_call.1} parent=11 // pred_check_branch
          %262 = sbr.rel (%p260) target = $region16
        $region15: #{tpu_custom_call.1} parent=11 // pred_region
          _
        $region16: #{tpu_custom_call.1} parent=11 // pred_fallthru
          _
        // Predicated region
        $region17: #{tpu_custom_call.1} parent=11 // pred_check
          %p263 = pneg %p114
        $region18: #{tpu_custom_call.1} parent=11 // pred_check_branch
          %265 = sbr.rel (%p263) target = $region20
        $region19: #{tpu_custom_call.1} parent=11 // pred_region
          _
        $region20: #{tpu_custom_call.1} parent=11 // pred_fallthru
          _
        // Predicated region
        $region21: #{tpu_custom_call.1} parent=11 // pred_check
          %p266 = pneg %p135
        $region22: #{tpu_custom_call.1} parent=11 // pred_check_branch
          %268 = sbr.rel (%p266) target = $region24
        $region23: #{tpu_custom_call.1} parent=11 // pred_region
          _
        $region24: #{tpu_custom_call.1} parent=11 // pred_fallthru
          _
        // Predicated region
        $region25: #{tpu_custom_call.1} parent=11 // pred_check
          %p269 = pneg %p156
        $region26: #{tpu_custom_call.1} parent=11 // pred_check_branch
          %271 = sbr.rel (%p269) target = $region28
        $region27: #{tpu_custom_call.1} parent=11 // pred_region
          _
        $region28: #{tpu_custom_call.1} parent=11 // pred_fallthru
          _
        // Predicated region
        $region29: #{tpu_custom_call.1} parent=11 // pred_check
          %p272 = pneg %p177
        $region30: #{tpu_custom_call.1} parent=11 // pred_check_branch
          %274 = sbr.rel (%p272) target = $region32
        $region31: #{tpu_custom_call.1} parent=11 // pred_region
          _
        $region32: #{tpu_custom_call.1} parent=11 // pred_fallthru
          _
        // Predicated region
        $region33: #{tpu_custom_call.1} parent=11 // pred_check
          %p275 = pneg %p198
        $region34: #{tpu_custom_call.1} parent=11 // pred_check_branch
          %277 = sbr.rel (%p275) target = $region36
        $region35: #{tpu_custom_call.1} parent=11 // pred_region
          _
        $region36: #{tpu_custom_call.1} parent=11 // pred_fallthru
          _
        // Predicated region
        $region37: #{tpu_custom_call.1} parent=11 // pred_check
          %p278 = pneg %p219
        $region38: #{tpu_custom_call.1} parent=11 // pred_check_branch
          %280 = sbr.rel (%p278) target = $region40
        $region39: #{tpu_custom_call.1} parent=11 // pred_region
          _
        $region40: #{tpu_custom_call.1} parent=11 // pred_fallthru
          _
      $region12: #{tpu_custom_call.1} parent=5 // pred_fallthru
        _
      %p281 = scmp.lt.s32.totalorder %s20, 2
      // Predicated region
      $region41: #{tpu_custom_call.1} parent=5 // pred_check
        %p282 = pneg %p281
      $region42: #{tpu_custom_call.1} parent=5 // pred_check_branch
        %284 = sbr.rel (%p282) target = $region44
      $region43: #{tpu_custom_call.1} parent=5 // pred_region
        // Predicated region
        $region45: #{tpu_custom_call.1} parent=43 // pred_check
          %p285 = pneg %p40
        $region46: #{tpu_custom_call.1} parent=43 // pred_check_branch
          %287 = sbr.rel (%p285) target = $region48
        $region47: #{tpu_custom_call.1} parent=43 // pred_region
          %s288 = smul.u32 16, %s20
          %p289 = scmp.lt.s32.totalorder %s288, 31
          %s290 = scalar_select %p289, %s288, 31
          %s291 = smul.addr %s290, 8
          %s292 = scalar_lea.vmem %s0, %s291
          %s293 = smul.u32 16, %s20
        $region48: #{tpu_custom_call.1} parent=43 // pred_fallthru
          _
        // Predicated region
        $region49: #{tpu_custom_call.1} parent=43 // pred_check
          %p294 = pneg %p66
        $region50: #{tpu_custom_call.1} parent=43 // pred_check_branch
          %296 = sbr.rel (%p294) target = $region52
        $region51: #{tpu_custom_call.1} parent=43 // pred_region
          %s297 = smul.u32 16, %s20
          %p298 = scmp.lt.s32.totalorder %s297, 31
          %s299 = scalar_select %p298, %s297, 31
          %s300 = smul.addr %s299, 8
          %s301 = scalar_lea.vmem %s1, %s300
          %s302 = smul.u32 16, %s20
        $region52: #{tpu_custom_call.1} parent=43 // pred_fallthru
          _
      $region44: #{tpu_custom_call.1} parent=5 // pred_fallthru
        _
      %p303 = scmp.le.s32.totalorder 1, %s20
      %p304 = scmp.lt.s32.totalorder %s20, 3
      %p305 = pnand %p303, %p304
      %p306 = pneg %p305
      // Predicated region
      $region53: #{tpu_custom_call.1} parent=5 // pred_check
        _
      $region54: #{tpu_custom_call.1} parent=5 // pred_check_branch
        %308 = sbr.rel (%p305) target = $region56
      $region55: #{tpu_custom_call.1} parent=5 // pred_region
        %s309 = ssub.s32 %s20, 1
        %s310 = smul.u32 16, %s25
        %p311 = scmp.lt.s32.totalorder %s310, 31
        %s312 = scalar_select %p311, %s310, 31
        %s313 = smul.addr %s312, 8
        %s314 = scalar_lea.vmem %s0, %s313
        %p315 = pneg %p46
        %p316 = pneg %p43
        %s317 = smul.u32 16, %s25
        %p318 = scmp.lt.s32.totalorder %s317, 31
        %s319 = scalar_select %p318, %s317, 31
        %s320 = smul.addr %s319, 8
        %s321 = scalar_lea.vmem %s1, %s320
        %p322 = pneg %p72
        %p323 = pneg %p69
        %p324 = pneg %p93
        %p325 = pneg %p90
        %p326 = pneg %p114
        %p327 = pneg %p111
        %p328 = pneg %p135
        %p329 = pneg %p132
        %p330 = pneg %p156
        %p331 = pneg %p153
        %p332 = pneg %p177
        %p333 = pneg %p174
        %p334 = pneg %p198
        %p335 = pneg %p195
        %p336 = pneg %p219
        %p337 = pneg %p216
        %p338 = pneg %p245
        %p339 = pneg %p242
        %s340 = sand.u32 %s232, 1
        %s341 = scalar_lea.sflag [#allocation4], %s340
        %s342 = sand.u32 %s232, 1
        %s343 = scalar_lea.vmem [#allocation3], %s342
        %s344 = smul.u32 16, %s25
        %p345 = scmp.lt.s32.totalorder %s344, 31
        %s346 = scalar_select %p345, %s344, 31
        %s347 = smul.addr %s346, 8
        %s348 = scalar_lea.vmem %s0, %s347
        %s349 = smul.u32 16, %s25
        %s350 = smul.u32 16, %s25
        %p351 = scmp.lt.s32.totalorder %s350, 31
        %s352 = scalar_select %p351, %s350, 31
        %s353 = smul.addr %s352, 8
        %s354 = scalar_lea.vmem %s1, %s353
        %s355 = smul.u32 16, %s25
        %v356 = vld [vmem:[%s348] sm:$0xff]
        %v357 = vld [vmem:[%s348 + $0x8] sm:$0xff]
        %v358 = vld [vmem:[%s348 + $0x10] sm:$0xff]
        %v359 = vld [vmem:[%s348 + $0x18] sm:$0xff]
        %v360 = vld [vmem:[%s348 + $0x20] sm:$0xff]
        %v361 = vld [vmem:[%s348 + $0x28] sm:$0xff]
        %v362 = vld [vmem:[%s348 + $0x30] sm:$0xff]
        %v363 = vld [vmem:[%s348 + $0x38] sm:$0xff]
        %v364 = vld [vmem:[%s348 + $0x40] sm:$0xff]
        %v365 = vld [vmem:[%s348 + $0x48] sm:$0xff]
        %v366 = vld [vmem:[%s348 + $0x50] sm:$0xff]
        %v367 = vld [vmem:[%s348 + $0x58] sm:$0xff]
        %v368 = vld [vmem:[%s348 + $0x60] sm:$0xff]
        %v369 = vld [vmem:[%s348 + $0x68] sm:$0xff]
        %v370 = vld [vmem:[%s348 + $0x70] sm:$0xff]
        %v371 = vld [vmem:[%s348 + $0x78] sm:$0xff]
        %v372 = vld [vmem:[%s2] sm:$0xff]
        %v373 = vld [vmem:[%s2 + $0x8] sm:$0xf]
        %v374 = vld [vmem:[%s354] sm:$0xff]
        %v375 = vld [vmem:[%s354 + $0x8] sm:$0xff]
        %v376 = vld [vmem:[%s354 + $0x10] sm:$0xff]
        %v377 = vld [vmem:[%s354 + $0x18] sm:$0xff]
        %v378 = vld [vmem:[%s354 + $0x20] sm:$0xff]
        %v379 = vld [vmem:[%s354 + $0x28] sm:$0xff]
        %v380 = vld [vmem:[%s354 + $0x30] sm:$0xff]
        %v381 = vld [vmem:[%s354 + $0x38] sm:$0xff]
        %v382 = vld [vmem:[%s354 + $0x40] sm:$0xff]
        %v383 = vld [vmem:[%s354 + $0x48] sm:$0xff]
        %v384 = vld [vmem:[%s354 + $0x50] sm:$0xff]
        %v385 = vld [vmem:[%s354 + $0x58] sm:$0xff]
        %v386 = vld [vmem:[%s354 + $0x60] sm:$0xff]
        %v387 = vld [vmem:[%s354 + $0x68] sm:$0xff]
        %v388 = vld [vmem:[%s354 + $0x70] sm:$0xff]
        %v389 = vld [vmem:[%s354 + $0x78] sm:$0xff]
        %v390 = vld [vmem:[%s3] sm:$0xf]
        %vm391 = vcmask 31744
        %v393 = vsel %vm391, %v374, 0
        %v396 = vsel %vm391, %v375, 0
        %v399 = vsel %vm391, %v376, 0
        %v402 = vsel %vm391, %v377, 0
        %v405 = vsel %vm391, %v378, 0
        %v408 = vsel %vm391, %v379, 0
        %v411 = vsel %vm391, %v380, 0
        %v414 = vsel %vm391, %v381, 0
        %v417 = vsel %vm391, %v382, 0
        %v420 = vsel %vm391, %v383, 0
        %v423 = vsel %vm391, %v384, 0
        %v426 = vsel %vm391, %v385, 0
        %v429 = vsel %vm391, %v386, 0
        %v432 = vsel %vm391, %v387, 0
        %v435 = vsel %vm391, %v388, 0
        %v438 = vsel %vm391, %v389, 0
        %vm440 = vcmask 1043456
        %v442 = vsel %vm440, %v390, 0
        %444 = vmatpush.msra.mxu0 0.0
        %445 = vmatpush.msra.mxu0 0.0
        %446 = vmatpush.msra.mxu0 0.0
        %447 = vmatpush.msra.mxu0 0.0
        %448 = vmatpush.msra.mxu0 0.0
        %449 = vmatpush.msra.mxu0 0.0
        %450 = vmatpush.msra.mxu0 0.0
        %451 = vmatpush.msra.mxu0 0.0
        %452 = vmatpush.msra.mxu0 0.0
        %453 = vmatpush.msra.mxu0 0.0
        %454 = vmatpush.msra.mxu0 0.0
        %455 = vmatpush.msra.mxu0 0.0
        %456 = vmatpush.msra.mxu0 0.0
        %457 = vmatpush.msra.mxu0 0.0
        %458 = vmatpush.msra.mxu0 0.0
        %459 = vmatpush.msra.mxu0 %v442
        %460 = vmatmul.f32.gmra.mxu0 %v393
        %v461 = vpop.f32.mrf.mxu0
        %v462 = vadd.f32 0.0, %v461
        %463 = vmatmul.f32.gmra.mxu0 %v396
        %v464 = vpop.f32.mrf.mxu0
        %v465 = vadd.f32 0.0, %v464
        %466 = vmatmul.f32.gmra.mxu0 %v399
        %v467 = vpop.f32.mrf.mxu0
        %v468 = vadd.f32 0.0, %v467
        %469 = vmatmul.f32.gmra.mxu0 %v402
        %v470 = vpop.f32.mrf.mxu0
        %v471 = vadd.f32 0.0, %v470
        %472 = vmatmul.f32.gmra.mxu0 %v405
        %v473 = vpop.f32.mrf.mxu0
        %v474 = vadd.f32 0.0, %v473
        %475 = vmatmul.f32.gmra.mxu0 %v408
        %v476 = vpop.f32.mrf.mxu0
        %v477 = vadd.f32 0.0, %v476
        %478 = vmatmul.f32.gmra.mxu0 %v411
        %v479 = vpop.f32.mrf.mxu0
        %v480 = vadd.f32 0.0, %v479
        %481 = vmatmul.f32.gmra.mxu0 %v414
        %v482 = vpop.f32.mrf.mxu0
        %v483 = vadd.f32 0.0, %v482
        %484 = vmatmul.f32.gmra.mxu0 %v417
        %v485 = vpop.f32.mrf.mxu0
        %v486 = vadd.f32 0.0, %v485
        %487 = vmatmul.f32.gmra.mxu0 %v420
        %v488 = vpop.f32.mrf.mxu0
        %v489 = vadd.f32 0.0, %v488
        %490 = vmatmul.f32.gmra.mxu0 %v423
        %v491 = vpop.f32.mrf.mxu0
        %v492 = vadd.f32 0.0, %v491
        %493 = vmatmul.f32.gmra.mxu0 %v426
        %v494 = vpop.f32.mrf.mxu0
        %v495 = vadd.f32 0.0, %v494
        %496 = vmatmul.f32.gmra.mxu0 %v429
        %v497 = vpop.f32.mrf.mxu0
        %v498 = vadd.f32 0.0, %v497
        %499 = vmatmul.f32.gmra.mxu0 %v432
        %v500 = vpop.f32.mrf.mxu0
        %v501 = vadd.f32 0.0, %v500
        %502 = vmatmul.f32.gmra.mxu0 %v435
        %v503 = vpop.f32.mrf.mxu0
        %v504 = vadd.f32 0.0, %v503
        %505 = vmatmul.f32.gmra.mxu0 %v438
        %v506 = vpop.f32.mrf.mxu0
        %v507 = vadd.f32 0.0, %v506
        %508 = vdwg.mxu0
        %vm509 = vcmask 97280
        %v511 = vsel %vm509, %v356, 0
        %v514 = vsel %vm509, %v357, 0
        %v517 = vsel %vm509, %v358, 0
        %v520 = vsel %vm509, %v359, 0
        %v523 = vsel %vm509, %v360, 0
        %v526 = vsel %vm509, %v361, 0
        %v529 = vsel %vm509, %v362, 0
        %v532 = vsel %vm509, %v363, 0
        %v535 = vsel %vm509, %v364, 0
        %v538 = vsel %vm509, %v365, 0
        %v541 = vsel %vm509, %v366, 0
        %v544 = vsel %vm509, %v367, 0
        %v547 = vsel %vm509, %v368, 0
        %v550 = vsel %vm509, %v369, 0
        %v553 = vsel %vm509, %v370, 0
        %v556 = vsel %vm509, %v371, 0
        %v559 = vsel %vm440, %v373, 0
        %561 = vmatpush.msra.mxu0 0.0
        %562 = vmatpush.msra.mxu0 0.0
        %563 = vmatpush.msra.mxu0 0.0
        %564 = vmatpush.msra.mxu0 0.0
        %565 = vmatpush.msra.mxu0 0.0
        %566 = vmatpush.msra.mxu0 0.0
        %567 = vmatpush.msra.mxu0 0.0
        %568 = vmatpush.msra.mxu0 0.0
        %569 = vmatpush.msra.mxu0 0.0
        %570 = vmatpush.msra.mxu0 0.0
        %571 = vmatpush.msra.mxu0 0.0
        %572 = vmatpush.msra.mxu0 0.0
        %573 = vmatpush.msra.mxu0 0.0
        %574 = vmatpush.msra.mxu0 0.0
        %575 = vmatpush.msra.mxu0 %v559
        %576 = vmatpush.msra.mxu0 %v372
        %577 = vmatmul.f32.gmra.mxu0 %v511
        %v578 = vpop.f32.mrf.mxu0
        %v579 = vadd.f32 %v462, %v578
        %580 = vmatmul.f32.gmra.mxu0 %v514
        %v581 = vpop.f32.mrf.mxu0
        %v582 = vadd.f32 %v465, %v581
        %583 = vmatmul.f32.gmra.mxu0 %v517
        %v584 = vpop.f32.mrf.mxu0
        %v585 = vadd.f32 %v468, %v584
        %586 = vmatmul.f32.gmra.mxu0 %v520
        %v587 = vpop.f32.mrf.mxu0
        %v588 = vadd.f32 %v471, %v587
        %589 = vmatmul.f32.gmra.mxu0 %v523
        %v590 = vpop.f32.mrf.mxu0
        %v591 = vadd.f32 %v474, %v590
        %592 = vmatmul.f32.gmra.mxu0 %v526
        %v593 = vpop.f32.mrf.mxu0
        %v594 = vadd.f32 %v477, %v593
        %595 = vmatmul.f32.gmra.mxu0 %v529
        %v596 = vpop.f32.mrf.mxu0
        %v597 = vadd.f32 %v480, %v596
        %598 = vmatmul.f32.gmra.mxu0 %v532
        %v599 = vpop.f32.mrf.mxu0
        %v600 = vadd.f32 %v483, %v599
        %601 = vmatmul.f32.gmra.mxu0 %v535
        %v602 = vpop.f32.mrf.mxu0
        %v603 = vadd.f32 %v486, %v602
        %604 = vmatmul.f32.gmra.mxu0 %v538
        %v605 = vpop.f32.mrf.mxu0
        %v606 = vadd.f32 %v489, %v605
        %607 = vmatmul.f32.gmra.mxu0 %v541
        %v608 = vpop.f32.mrf.mxu0
        %v609 = vadd.f32 %v492, %v608
        %610 = vmatmul.f32.gmra.mxu0 %v544
        %v611 = vpop.f32.mrf.mxu0
        %v612 = vadd.f32 %v495, %v611
        %613 = vmatmul.f32.gmra.mxu0 %v547
        %v614 = vpop.f32.mrf.mxu0
        %v615 = vadd.f32 %v498, %v614
        %616 = vmatmul.f32.gmra.mxu0 %v550
        %v617 = vpop.f32.mrf.mxu0
        %v618 = vadd.f32 %v501, %v617
        %619 = vmatmul.f32.gmra.mxu0 %v553
        %v620 = vpop.f32.mrf.mxu0
        %v621 = vadd.f32 %v504, %v620
        %622 = vmatmul.f32.gmra.mxu0 %v556
        %v623 = vpop.f32.mrf.mxu0
        %v624 = vadd.f32 %v507, %v623
        %625 = vdwg.mxu0
        %v626 = vld [vmem:[%s4] sm:$0x1]
        %v628 = vperm.slane %v626, 0
        %v630 = vadd.f32 %v579, %v628
        %v631 = vadd.f32 %v582, %v628
        %v632 = vadd.f32 %v585, %v628
        %v633 = vadd.f32 %v588, %v628
        %v634 = vadd.f32 %v591, %v628
        %v635 = vadd.f32 %v594, %v628
        %v636 = vadd.f32 %v597, %v628
        %v637 = vadd.f32 %v600, %v628
        %v638 = vadd.f32 %v603, %v628
        %v639 = vadd.f32 %v606, %v628
        %v640 = vadd.f32 %v609, %v628
        %v641 = vadd.f32 %v612, %v628
        %v642 = vadd.f32 %v615, %v628
        %v643 = vadd.f32 %v618, %v628
        %v644 = vadd.f32 %v621, %v628
        %v645 = vadd.f32 %v624, %v628
        %v646 = vmax.f32 %v630, 0.0
        %v647 = vmax.f32 %v631, 0.0
        %v648 = vmax.f32 %v632, 0.0
        %v649 = vmax.f32 %v633, 0.0
        %v650 = vmax.f32 %v634, 0.0
        %v651 = vmax.f32 %v635, 0.0
        %v652 = vmax.f32 %v636, 0.0
        %v653 = vmax.f32 %v637, 0.0
        %v654 = vmax.f32 %v638, 0.0
        %v655 = vmax.f32 %v639, 0.0
        %v656 = vmax.f32 %v640, 0.0
        %v657 = vmax.f32 %v641, 0.0
        %v658 = vmax.f32 %v642, 0.0
        %v659 = vmax.f32 %v643, 0.0
        %v660 = vmax.f32 %v644, 0.0
        %v661 = vmax.f32 %v645, 0.0
        %v662 = vld [vmem:[%s5] sm:$0xff]
        %v663 = vld [vmem:[%s5 + $0x8] sm:$0xff]
        %v664 = vld [vmem:[%s5 + $0x10] sm:$0xff]
        %v665 = vld [vmem:[%s5 + $0x18] sm:$0xff]
        %v666 = vld [vmem:[%s6] sm:$0x1]
        %v668 = vperm.slane %v666, 0
        %vm670 = vcmask 261120
        %v672 = vsel %vm670, %v646, 0
        %v675 = vsel %vm670, %v647, 0
        %v678 = vsel %vm670, %v648, 0
        %v681 = vsel %vm670, %v649, 0
        %v684 = vsel %vm670, %v650, 0
        %v687 = vsel %vm670, %v651, 0
        %v690 = vsel %vm670, %v652, 0
        %v693 = vsel %vm670, %v653, 0
        %v696 = vsel %vm670, %v654, 0
        %v699 = vsel %vm670, %v655, 0
        %v702 = vsel %vm670, %v656, 0
        %v705 = vsel %vm670, %v657, 0
        %v708 = vsel %vm670, %v658, 0
        %v711 = vsel %vm670, %v659, 0
        %v714 = vsel %vm670, %v660, 0
        %v717 = vsel %vm670, %v661, 0
        %719 = vmatpush.msra.mxu0 0.0
        %720 = vmatpush.msra.mxu0 0.0
        %721 = vmatpush.msra.mxu0 0.0
        %722 = vmatpush.msra.mxu0 0.0
        %723 = vmatpush.msra.mxu0 0.0
        %724 = vmatpush.msra.mxu0 0.0
        %725 = vmatpush.msra.mxu0 0.0
        %726 = vmatpush.msra.mxu0 0.0
        %727 = vmatpush.msra.mxu0 0.0
        %728 = vmatpush.msra.mxu0 0.0
        %729 = vmatpush.msra.mxu0 0.0
        %730 = vmatpush.msra.mxu0 0.0
        %731 = vmatpush.msra.mxu0 %v665
        %732 = vmatpush.msra.mxu0 %v664
        %733 = vmatpush.msra.mxu0 %v663
        %734 = vmatpush.msra.mxu0 %v662
        %735 = vmatmul.f32.gmra.mxu0 %v672
        %v736 = vpop.f32.mrf.mxu0
        %v737 = vadd.f32 %v668, %v736
        %738 = vmatmul.f32.gmra.mxu0 %v675
        %v739 = vpop.f32.mrf.mxu0
        %v740 = vadd.f32 %v668, %v739
        %741 = vmatmul.f32.gmra.mxu0 %v678
        %v742 = vpop.f32.mrf.mxu0
        %v743 = vadd.f32 %v668, %v742
        %744 = vmatmul.f32.gmra.mxu0 %v681
        %v745 = vpop.f32.mrf.mxu0
        %v746 = vadd.f32 %v668, %v745
        %747 = vmatmul.f32.gmra.mxu0 %v684
        %v748 = vpop.f32.mrf.mxu0
        %v749 = vadd.f32 %v668, %v748
        %750 = vmatmul.f32.gmra.mxu0 %v687
        %v751 = vpop.f32.mrf.mxu0
        %v752 = vadd.f32 %v668, %v751
        %753 = vmatmul.f32.gmra.mxu0 %v690
        %v754 = vpop.f32.mrf.mxu0
        %v755 = vadd.f32 %v668, %v754
        %756 = vmatmul.f32.gmra.mxu0 %v693
        %v757 = vpop.f32.mrf.mxu0
        %v758 = vadd.f32 %v668, %v757
        %759 = vmatmul.f32.gmra.mxu0 %v696
        %v760 = vpop.f32.mrf.mxu0
        %v761 = vadd.f32 %v668, %v760
        %762 = vmatmul.f32.gmra.mxu0 %v699
        %v763 = vpop.f32.mrf.mxu0
        %v764 = vadd.f32 %v668, %v763
        %765 = vmatmul.f32.gmra.mxu0 %v702
        %v766 = vpop.f32.mrf.mxu0
        %v767 = vadd.f32 %v668, %v766
        %768 = vmatmul.f32.gmra.mxu0 %v705
        %v769 = vpop.f32.mrf.mxu0
        %v770 = vadd.f32 %v668, %v769
        %771 = vmatmul.f32.gmra.mxu0 %v708
        %v772 = vpop.f32.mrf.mxu0
        %v773 = vadd.f32 %v668, %v772
        %774 = vmatmul.f32.gmra.mxu0 %v711
        %v775 = vpop.f32.mrf.mxu0
        %v776 = vadd.f32 %v668, %v775
        %777 = vmatmul.f32.gmra.mxu0 %v714
        %v778 = vpop.f32.mrf.mxu0
        %v779 = vadd.f32 %v668, %v778
        %780 = vmatmul.f32.gmra.mxu0 %v717
        %v781 = vpop.f32.mrf.mxu0
        %v782 = vadd.f32 %v668, %v781
        %783 = vdwg.mxu0
        %v784 = vmax.f32 %v737, 0.0
        %v785 = vmax.f32 %v740, 0.0
        %v786 = vmax.f32 %v743, 0.0
        %v787 = vmax.f32 %v746, 0.0
        %v788 = vmax.f32 %v749, 0.0
        %v789 = vmax.f32 %v752, 0.0
        %v790 = vmax.f32 %v755, 0.0
        %v791 = vmax.f32 %v758, 0.0
        %v792 = vmax.f32 %v761, 0.0
        %v793 = vmax.f32 %v764, 0.0
        %v794 = vmax.f32 %v767, 0.0
        %v795 = vmax.f32 %v770, 0.0
        %v796 = vmax.f32 %v773, 0.0
        %v797 = vmax.f32 %v776, 0.0
        %v798 = vmax.f32 %v779, 0.0
        %v799 = vmax.f32 %v782, 0.0
        %v800 = vld [vmem:[%s7] sm:$0x1]
        %v802 = vperm.slane %v800, 0
        %v804 = vmul.f32 %v784, %v802
        %v805 = vmul.f32 %v785, %v802
        %v806 = vmul.f32 %v786, %v802
        %v807 = vmul.f32 %v787, %v802
        %v808 = vmul.f32 %v788, %v802
        %v809 = vmul.f32 %v789, %v802
        %v810 = vmul.f32 %v790, %v802
        %v811 = vmul.f32 %v791, %v802
        %v812 = vmul.f32 %v792, %v802
        %v813 = vmul.f32 %v793, %v802
        %v814 = vmul.f32 %v794, %v802
        %v815 = vmul.f32 %v795, %v802
        %v816 = vmul.f32 %v796, %v802
        %v817 = vmul.f32 %v797, %v802
        %v818 = vmul.f32 %v798, %v802
        %v819 = vmul.f32 %v799, %v802
        %v820 = vsel %vm670, %v804, 0.0
        %821 = vadd.xlane.f32.xlu0 %v820
        %v822 = vpop.xlane.xlu0 %821
        %v823 = vsel %vm670, %v805, 0.0
        %824 = vadd.xlane.f32.xlu0 %v823
        %v825 = vpop.xlane.xlu0 %824
        %v826 = vsel %vm670, %v806, 0.0
        %827 = vadd.xlane.f32.xlu0 %v826
        %v828 = vpop.xlane.xlu0 %827
        %v829 = vsel %vm670, %v807, 0.0
        %830 = vadd.xlane.f32.xlu0 %v829
        %v831 = vpop.xlane.xlu0 %830
        %v832 = vsel %vm670, %v808, 0.0
        %833 = vadd.xlane.f32.xlu0 %v832
        %v834 = vpop.xlane.xlu0 %833
        %v835 = vsel %vm670, %v809, 0.0
        %836 = vadd.xlane.f32.xlu0 %v835
        %v837 = vpop.xlane.xlu0 %836
        %v838 = vsel %vm670, %v810, 0.0
        %839 = vadd.xlane.f32.xlu0 %v838
        %v840 = vpop.xlane.xlu0 %839
        %v841 = vsel %vm670, %v811, 0.0
        %842 = vadd.xlane.f32.xlu0 %v841
        %v843 = vpop.xlane.xlu0 %842
        %v844 = vsel %vm670, %v812, 0.0
        %845 = vadd.xlane.f32.xlu0 %v844
        %v846 = vpop.xlane.xlu0 %845
        %v847 = vsel %vm670, %v813, 0.0
        %848 = vadd.xlane.f32.xlu0 %v847
        %v849 = vpop.xlane.xlu0 %848
        %v850 = vsel %vm670, %v814, 0.0
        %851 = vadd.xlane.f32.xlu0 %v850
        %v852 = vpop.xlane.xlu0 %851
        %v853 = vsel %vm670, %v815, 0.0
        %854 = vadd.xlane.f32.xlu0 %v853
        %v855 = vpop.xlane.xlu0 %854
        %v856 = vsel %vm670, %v816, 0.0
        %857 = vadd.xlane.f32.xlu0 %v856
        %v858 = vpop.xlane.xlu0 %857
        %v859 = vsel %vm670, %v817, 0.0
        %860 = vadd.xlane.f32.xlu0 %v859
        %v861 = vpop.xlane.xlu0 %860
        %v862 = vsel %vm670, %v818, 0.0
        %863 = vadd.xlane.f32.xlu0 %v862
        %v864 = vpop.xlane.xlu0 %863
        %v865 = vsel %vm670, %v819, 0.0
        %866 = vadd.xlane.f32.xlu0 %v865
        %v867 = vpop.xlane.xlu0 %866
        %v868 = vld [vmem:[#allocation2] sm:$0x1]
        %s869 = vtos %v868
        %v870 = vstv %s869
        %v871 = vadd.f32 %v822, %v870
        %v872 = vadd.f32 %v825, %v870
        %v873 = vadd.f32 %v828, %v870
        %v874 = vadd.f32 %v831, %v870
        %v875 = vadd.f32 %v834, %v870
        %v876 = vadd.f32 %v837, %v870
        %v877 = vadd.f32 %v840, %v870
        %v878 = vadd.f32 %v843, %v870
        %v879 = vadd.f32 %v846, %v870
        %v880 = vadd.f32 %v849, %v870
        %v881 = vadd.f32 %v852, %v870
        %v882 = vadd.f32 %v855, %v870
        %v883 = vadd.f32 %v858, %v870
        %v884 = vadd.f32 %v861, %v870
        %v885 = vadd.f32 %v864, %v870
        %v886 = vadd.f32 %v867, %v870
        %v887 = vmul.f32 %v871, 100.0
        %v888 = vmul.f32 %v872, 100.0
        %v889 = vmul.f32 %v873, 100.0
        %v890 = vmul.f32 %v874, 100.0
        %v891 = vmul.f32 %v875, 100.0
        %v892 = vmul.f32 %v876, 100.0
        %v893 = vmul.f32 %v877, 100.0
        %v894 = vmul.f32 %v878, 100.0
        %v895 = vmul.f32 %v879, 100.0
        %v896 = vmul.f32 %v880, 100.0
        %v897 = vmul.f32 %v881, 100.0
        %v898 = vmul.f32 %v882, 100.0
        %v899 = vmul.f32 %v883, 100.0
        %v900 = vmul.f32 %v884, 100.0
        %v901 = vmul.f32 %v885, 100.0
        %v902 = vmul.f32 %v886, 100.0
        %v919 = vlaneseq
        %v920 = vand.u32 %v919, 127
        %v921 = vperm.slane %v887, %v920
        %v922 = vadd.s32 %v920, 4294967288
        %v923 = vperm.slane %v888, %v922
        %vm924 = vcmask 130112
        %v925 = vsel %vm924, %v923, %v921
        %v926 = vadd.s32 %v920, 4294967280
        %v927 = vperm.slane %v889, %v926
        %vm928 = vcmask 195712
        %v929 = vsel %vm928, %v927, %v925
        %v930 = vadd.s32 %v920, 4294967272
        %v931 = vperm.slane %v890, %v930
        %vm932 = vcmask 261312
        %v933 = vsel %vm932, %v931, %v929
        %v934 = vadd.s32 %v920, 4294967264
        %v935 = vperm.slane %v891, %v934
        %vm936 = vcmask 326912
        %v937 = vsel %vm936, %v935, %v933
        %v938 = vadd.s32 %v920, 4294967256
        %v939 = vperm.slane %v892, %v938
        %vm940 = vcmask 392512
        %v941 = vsel %vm940, %v939, %v937
        %v942 = vadd.s32 %v920, 4294967248
        %v943 = vperm.slane %v893, %v942
        %vm944 = vcmask 458112
        %v945 = vsel %vm944, %v943, %v941
        %v946 = vadd.s32 %v920, 4294967240
        %v947 = vperm.slane %v894, %v946
        %vm948 = vcmask 523712
        %v949 = vsel %vm948, %v947, %v945
        %v950 = vadd.s32 %v920, 4294967232
        %v951 = vperm.slane %v895, %v950
        %vm952 = vcmask 589312
        %v953 = vsel %vm952, %v951, %v949
        %v954 = vadd.s32 %v920, 4294967224
        %v955 = vperm.slane %v896, %v954
        %vm956 = vcmask 654912
        %v957 = vsel %vm956, %v955, %v953
        %v958 = vadd.s32 %v920, 4294967216
        %v959 = vperm.slane %v897, %v958
        %vm960 = vcmask 720512
        %v961 = vsel %vm960, %v959, %v957
        %v962 = vadd.s32 %v920, 4294967208
        %v963 = vperm.slane %v898, %v962
        %vm964 = vcmask 786112
        %v965 = vsel %vm964, %v963, %v961
        %v966 = vadd.s32 %v920, 4294967200
        %v967 = vperm.slane %v899, %v966
        %vm968 = vcmask 851712
        %v969 = vsel %vm968, %v967, %v965
        %v970 = vadd.s32 %v920, 4294967192
        %v971 = vperm.slane %v900, %v970
        %vm972 = vcmask 917312
        %v973 = vsel %vm972, %v971, %v969
        %v974 = vadd.s32 %v920, 4294967184
        %v975 = vperm.slane %v901, %v974
        %vm976 = vcmask 982912
        %v977 = vsel %vm976, %v975, %v973
        %v978 = vadd.s32 %v920, 4294967176
        %v979 = vperm.slane %v902, %v978
        %vm980 = vcmask 1048512
        %v981 = vsel %vm980, %v979, %v977
        %983 = vst [vmem:[%s343] sm:$0x1] %v981
        %s984 = sand.u32 %s232, 1
        %s985 = scalar_lea.sflag [#allocation4], %s984
        %s986 = sand.u32 %s232, 1
        %s987 = scalar_lea.vmem [#allocation3], %s986
        // Predicated region
        $region57: #{tpu_custom_call.1} parent=55 // pred_check
          %p988 = pneg %p242
        $region58: #{tpu_custom_call.1} parent=55 // pred_check_branch
          %990 = sbr.rel (%p988) target = $region60
        $region59: #{tpu_custom_call.1} parent=55 // pred_region
          %992 = vsyncadd %s985, 0
          %s993 = scalar_lea.hbm %s9, %s25
          %s995 = sshll.u32 %s987, 4
          %s996 = int_to_ptr.vmem [resolvable:$true] %s995
          %s997 = sshll.u32 %s993, 4
          %s998 = int_to_ptr.hbm [resolvable:$true] %s997
          %1000 = dma.vmem_to_hbm [thread:$0]  %s996, 16, %s998, %s985
        $region60: #{tpu_custom_call.1} parent=55 // pred_fallthru
          _
      $region56: #{tpu_custom_call.1} parent=5 // pred_fallthru
        _
      %p1001 = scmp.le.s32.totalorder 2, %s20
      // Predicated region
      $region61: #{tpu_custom_call.1} parent=5 // pred_check
        %p1002 = pneg %p1001
      $region62: #{tpu_custom_call.1} parent=5 // pred_check_branch
        %1004 = sbr.rel (%p1002) target = $region64
      $region63: #{tpu_custom_call.1} parent=5 // pred_region
        %s1005 = ssub.s32 %s20, 2
        // Predicated region
        $region65: #{tpu_custom_call.1} parent=63 // pred_check
          %p1006 = pneg %p248
        $region66: #{tpu_custom_call.1} parent=63 // pred_check_branch
          %1008 = sbr.rel (%p1006) target = $region68
        $region67: #{tpu_custom_call.1} parent=63 // pred_region
          %s1009 = sand.u32 %s233, 1
          %s1010 = scalar_lea.sflag [#allocation4], %s1009
          %s1011 = sand.u32 %s233, 1
          %s1012 = scalar_lea.vmem [#allocation3], %s1011
          %1014 = dma.done %s1010, 16
        $region68: #{tpu_custom_call.1} parent=63 // pred_fallthru
          _
      $region64: #{tpu_custom_call.1} parent=5 // pred_fallthru
        _
    $region6: #{tpu_custom_call.1} parent=1 // loop_footer
      %s24 = sadd.s32 1, %s20
    $region7: #{tpu_custom_call.1} parent=1 // loop_footer_branch
      %19 = sbr.rel target = $region3
    $region8: #{tpu_custom_call.1} parent=1 // loop_exit
      _
    %1015 = vsyncpa [#allocation4], 1
    %s1016 = scalar_lea.sflag [#allocation4], 1
    %1017 = vsyncpa %s1016, 1

</llo_original>
